<compile_context>
chip_gen: v7x
topology: tpu7x:2x2x1
jax: 0.10.0
libtpu: 0.0.40
codegen_flags: <defaults>
</compile_context>

<pallas_src>
import functools

import jax
import jax.numpy as jnp
from jax import lax
from jax.experimental import pallas as pl
from jax.experimental.pallas import tpu as pltpu


def _pos_embed_ln_kernel(table_ref, gamma_ref, beta_ref, out_ref, norm_ref, *, eps):
    """grid = (S_tiles, B_tiles); batch is the innermost (fastest) axis.

    table_ref: (tS, D)      rows [s*tS, s*tS + tS) of the position-embedding table
    gamma_ref: (1, D)       LayerNorm weight
    beta_ref:  (1, D)       LayerNorm bias
    out_ref:   (tB, tS, D)  output block for (batch tile b, seq tile s)
    norm_ref:  (tS, D)      VMEM scratch holding the normalized tile; persists across
               grid steps and is recomputed only when a new S tile starts (b == 0).
    """
    b = pl.program_id(1)

    @pl.when(b == 0)
    def _compute_tile_once():
        emb = table_ref[...].astype(jnp.float32)                    # (tS, D)
        mean = jnp.mean(emb, axis=-1, keepdims=True)                # (tS, 1)
        centered = emb - mean
        var = jnp.mean(centered * centered, axis=-1, keepdims=True)
        inv = lax.rsqrt(var + eps)
        normed = centered * inv * gamma_ref[...] + beta_ref[...]    # (tS, D)
        norm_ref[...] = normed.astype(norm_ref.dtype)

    # Every step (including b == 0) just replicates the normalized tile across the
    # batch tile; the B*S*D HBM writeback is the true cost of this op.
    out_ref[...] = jnp.broadcast_to(norm_ref[...], out_ref.shape)


def _pick_tiles(B, s_cands, D, in_itemsize, out_itemsize, budget):
    """Pick (tB, tS) maximizing the per-step output block (fewest grid steps)
    subject to a soft VMEM budget.

    Per-step working set ~= 2*tS*D*in (double-buffered table tile)
                          + tS*D*out  (scratch)
                          + 2*tB*tS*D*out (double-buffered output block).
    """
    b_cands = [d for d in range(1, B + 1) if B % d == 0]
    best, best_key = None, None
    for tS in s_cands:
        base = tS * D * (2 * in_itemsize + out_itemsize)
        fits = [tB for tB in b_cands
                if base + 2 * tB * tS * D * out_itemsize <= budget]
        if not fits:
            continue
        tB = fits[-1]
        key = (tB * tS, tS)          # fewest steps; tie-break toward larger seq tile
        if best_key is None or key > best_key:
            best_key, best = key, (tB, tS)
    if best is None:
        best = (1, s_cands[0])       # budget too small; minimal tiles (budget is soft)
    return best


def position_embedding_forward(x, emb_table, gamma, beta, *,
                               eps=1e-6,
                               out_dtype=jnp.float32,
                               vmem_budget_bytes=20 * 1024 * 1024,
                               seq_tile=None,
                               batch_tile=None):
    """x: (B, S) int token ids (only the shape is used, as in the PyTorch module).
    emb_table: (max_len, D) float32. gamma/beta: (D,). Returns (B, S, D) out_dtype."""
    B, S = x.shape
    max_len, D = emb_table.shape
    assert S <= max_len, "sequence length exceeds max_len of the position table"

    gamma2d = gamma.reshape(1, D).astype(jnp.float32)
    beta2d = beta.reshape(1, D).astype(jnp.float32)

    in_itemsize = jnp.dtype(emb_table.dtype).itemsize
    out_itemsize = jnp.dtype(out_dtype).itemsize

    if S % 8 == 0:
        # Tile S straight out of the full table (no wrapper-side slice).
        table = emb_table
        s_cands = [d for d in range(8, S + 1, 8) if S % d == 0]
        table_index_map = lambda s, b: (s, 0)
    else:
        # Ragged-S fallback: a single full-extent (S, D) block of the sliced table
        # (full-extent blocks are exempt from the (8, 128) divisibility rule).
        table = lax.slice(emb_table, (0, 0), (S, D))
        s_cands = [S]
        table_index_map = lambda s, b: (0, 0)

    tB, tS = _pick_tiles(B, s_cands, D, in_itemsize, out_itemsize, vmem_budget_bytes)
    if seq_tile is not None:
        assert S % seq_tile == 0 and (seq_tile % 8 == 0 or seq_tile == S)
        tS = seq_tile
    if batch_tile is not None:
        assert B % batch_tile == 0
        tB = batch_tile

    grid_s = S // tS
    grid_b = B // tB

    kernel = functools.partial(_pos_embed_ln_kernel, eps=eps)

    out = pl.pallas_call(
        kernel,
        out_shape=jax.ShapeDtypeStruct((B, S, D), out_dtype),
        grid_spec=pltpu.PrefetchScalarGridSpec(
            num_scalar_prefetch=0,
            grid=(grid_s, grid_b),                              # batch innermost: reuse scratch
            in_specs=[
                pl.BlockSpec((tS, D), table_index_map),         # position-embedding rows
                pl.BlockSpec((1, D), lambda s, b: (0, 0)),      # LN gamma (constant block)
                pl.BlockSpec((1, D), lambda s, b: (0, 0)),      # LN beta  (constant block)
            ],
            out_specs=pl.BlockSpec((tB, tS, D), lambda s, b: (b, s, 0)),
            scratch_shapes=[pltpu.VMEM((tS, D), out_dtype)],
        ),
        compiler_params=pltpu.CompilerParams(
            # S tiles may shard across TensorCores (v7x megacore); the batch axis must
            # stay "arbitrary" because the compute-once scratch is carried along it.
            dimension_semantics=("parallel", "arbitrary"),
            vmem_limit_bytes=32 * 1024 * 1024,
        ),
    )(table, gamma2d, beta2d)
    return out


def reference_forward(x, emb_table, gamma, beta, eps=1e-6):
    B, S = x.shape
    D = emb_table.shape[1]
    emb = jnp.broadcast_to(emb_table[:S][None], (B, S, D)).astype(jnp.float32)
    mean = emb.mean(-1, keepdims=True)
    var = ((emb - mean) ** 2).mean(-1, keepdims=True)
    return (emb - mean) / jnp.sqrt(var + eps) * gamma + beta


if __name__ == "__main__":
    key = jax.random.PRNGKey(0)
    k1, k2, k3 = jax.random.split(key, 3)

    # Config 1: small shapes consistent with the module defaults (d_embed=32, max_len=256).
    d_embed, max_len, batch, seq = 32, 256, 2, 8
    emb_table = jax.random.normal(k1, (max_len, d_embed), dtype=jnp.float32)
    gamma = jnp.ones((d_embed,), dtype=jnp.float32)   # nn.LayerNorm default init
    beta = jnp.zeros((d_embed,), dtype=jnp.float32)
    x = jax.random.randint(k2, (batch, seq), 0, max_len, dtype=jnp.int32)

    out = jax.block_until_ready(position_embedding_forward(x, emb_table, gamma, beta))
    ref = reference_forward(x, emb_table, gamma, beta)
    assert out.shape == (batch, seq, d_embed)
    assert jnp.allclose(out, ref, atol=1e-5, rtol=1e-5)

    # Config 2: forces a multi-tile grid (4 S-tiles x 3 batch steps) to exercise the
    # compute-once-per-S-tile scratch reuse across the batch axis.
    d2, s2, b2 = 128, 128, 3
    table2 = jax.random.normal(k3, (256, d2), dtype=jnp.float32)
    gamma2 = 0.5 + jax.random.uniform(k1, (d2,), dtype=jnp.float32)
    beta2 = 0.1 * jax.random.normal(k2, (d2,), dtype=jnp.float32)
    x2 = jnp.zeros((b2, s2), dtype=jnp.int32)
    out2 = jax.block_until_ready(
        position_embedding_forward(x2, table2, gamma2, beta2,
                                   seq_tile=32, batch_tile=1))
    ref2 = reference_forward(x2, table2, gamma2, beta2)
    assert out2.shape == (b2, s2, d2)
    assert jnp.allclose(out2, ref2, atol=1e-5, rtol=1e-5)

    # Config 3: ragged sequence length (S not a multiple of 8) -> full-extent fallback.
    d3, s3, b3 = 32, 12, 2
    table3 = jax.random.normal(k2, (256, d3), dtype=jnp.float32)
    gamma3 = jnp.ones((d3,), dtype=jnp.float32)
    beta3 = jnp.zeros((d3,), dtype=jnp.float32)
    x3 = jnp.zeros((b3, s3), dtype=jnp.int32)
    out3 = jax.block_until_ready(position_embedding_forward(x3, table3, gamma3, beta3))
    ref3 = reference_forward(x3, table3, gamma3, beta3)
    assert out3.shape == (b3, s3, d3)
    assert jnp.allclose(out3, ref3, atol=1e-5, rtol=1e-5)

    print("KERNEL_OK")
</pallas_src>

<mosaic_0001>
module attributes {stable_mosaic.version = 11 : i64} {
  func.func @_pos_embed_ln_kernel(%arg0: i32, %arg1: i32, %arg2: memref<8x32xf32, #tpu.memory_space<vmem>>, %arg3: memref<1x32xf32, #tpu.memory_space<vmem>>, %arg4: memref<1x32xf32, #tpu.memory_space<vmem>>, %arg5: memref<2x8x32xf32, #tpu.memory_space<vmem>>, %arg6: memref<8x32xf32, #tpu.memory_space<vmem>>) attributes {dimension_semantics = [#tpu.dimension_semantics<parallel>, #tpu.dimension_semantics<arbitrary>], iteration_bounds = array<i64: 1, 1>, scalar_prefetch = 0 : i64, scratch_operands = 1 : i64, tpu.core_type = #tpu.core_type<tc>, window_params = [{transform_indices = @transform_0, window_bounds = array<i64: 8, 32>}, {pipeline_mode = #tpu.pipeline_mode<synchronous>, transform_indices = @transform_1, window_bounds = array<i64: 1, 32>}, {pipeline_mode = #tpu.pipeline_mode<synchronous>, transform_indices = @transform_2, window_bounds = array<i64: 1, 32>}, {transform_indices = @transform_3, window_bounds = array<i64: 2, 8, 32>}]} {
    %c0_i32 = arith.constant 0 : i32
    %0 = arith.cmpi eq, %arg1, %c0_i32 : i32
    %1 = arith.extui %0 : i1 to i32
    %c0_i32_0 = arith.constant 0 : i32
    %2 = arith.cmpi ne, %1, %c0_i32_0 : i32
    scf.if %2 {
      %c0_5 = arith.constant 0 : index
      %c0_6 = arith.constant 0 : index
      %7 = vector.load %arg2[%c0_5, %c0_6] : memref<8x32xf32, #tpu.memory_space<vmem>>, vector<8x32xf32>
      %cst = arith.constant dense<0.000000e+00> : vector<8xf32>
      %8 = vector.multi_reduction <add>, %7, %cst [1] : vector<8x32xf32> to vector<8xf32>
      %9 = vector.shape_cast %8 : vector<8xf32> to vector<8x1xf32>
      %cst_7 = arith.constant 3.200000e+01 : f32
      %10 = vector.broadcast %cst_7 : f32 to vector<8x1xf32>
      %11 = arith.divf %9, %10 : vector<8x1xf32>
      %12 = vector.broadcast %11 : vector<8x1xf32> to vector<8x32xf32>
      %13 = arith.subf %7, %12 : vector<8x32xf32>
      %14 = arith.mulf %13, %13 : vector<8x32xf32>
      %cst_8 = arith.constant dense<0.000000e+00> : vector<8xf32>
      %15 = vector.multi_reduction <add>, %14, %cst_8 [1] : vector<8x32xf32> to vector<8xf32>
      %16 = vector.shape_cast %15 : vector<8xf32> to vector<8x1xf32>
      %cst_9 = arith.constant 3.200000e+01 : f32
      %17 = vector.broadcast %cst_9 : f32 to vector<8x1xf32>
      %18 = arith.divf %16, %17 : vector<8x1xf32>
      %cst_10 = arith.constant 9.99999997E-7 : f32
      %19 = vector.broadcast %cst_10 : f32 to vector<8x1xf32>
      %20 = arith.addf %18, %19 : vector<8x1xf32>
      %21 = math.rsqrt %20 : vector<8x1xf32>
      %22 = vector.broadcast %21 : vector<8x1xf32> to vector<8x32xf32>
      %23 = arith.mulf %13, %22 : vector<8x32xf32>
      %c0_11 = arith.constant 0 : index
      %c0_12 = arith.constant 0 : index
      %24 = vector.load %arg3[%c0_11, %c0_12] : memref<1x32xf32, #tpu.memory_space<vmem>>, vector<1x32xf32>
      %25 = vector.broadcast %24 : vector<1x32xf32> to vector<8x32xf32>
      %26 = arith.mulf %23, %25 : vector<8x32xf32>
      %c0_13 = arith.constant 0 : index
      %c0_14 = arith.constant 0 : index
      %27 = vector.load %arg4[%c0_13, %c0_14] : memref<1x32xf32, #tpu.memory_space<vmem>>, vector<1x32xf32>
      %28 = vector.broadcast %27 : vector<1x32xf32> to vector<8x32xf32>
      %29 = arith.addf %26, %28 : vector<8x32xf32>
      %c0_15 = arith.constant 0 : index
      %c0_16 = arith.constant 0 : index
      %30 = vector.load %arg6[%c0_15, %c0_16] : memref<8x32xf32, #tpu.memory_space<vmem>>, vector<8x32xf32>
      tpu.vector_store %arg6[%c0_15, %c0_16], %29 {strides = array<i32>} : memref<8x32xf32, #tpu.memory_space<vmem>>, vector<8x32xf32>,
    } else {
    }
    %c0 = arith.constant 0 : index
    %c0_1 = arith.constant 0 : index
    %3 = vector.load %arg6[%c0, %c0_1] : memref<8x32xf32, #tpu.memory_space<vmem>>, vector<8x32xf32>
    %4 = vector.shape_cast %3 : vector<8x32xf32> to vector<1x8x32xf32>
    %5 = vector.broadcast %4 : vector<1x8x32xf32> to vector<2x8x32xf32>
    %c0_2 = arith.constant 0 : index
    %c0_3 = arith.constant 0 : index
    %c0_4 = arith.constant 0 : index
    %6 = vector.load %arg5[%c0_2, %c0_3, %c0_4] : memref<2x8x32xf32, #tpu.memory_space<vmem>>, vector<2x8x32xf32>
    tpu.vector_store %arg5[%c0_2, %c0_3, %c0_4], %5 {strides = array<i32>} : memref<2x8x32xf32, #tpu.memory_space<vmem>>, vector<2x8x32xf32>,
    return
  }
  func.func @transform_0(%arg0: i32, %arg1: i32) -> (i32, i32) {
    %c0_i32 = arith.constant 0 : i32
    %c0_i32_0 = arith.constant 0 : i32
    return %arg0, %c0_i32 : i32, i32
  }
  func.func @transform_1(%arg0: i32, %arg1: i32) -> (i32, i32) {
    %c0_i32 = arith.constant 0 : i32
    %c0_i32_0 = arith.constant 0 : i32
    %c0_i32_1 = arith.constant 0 : i32
    return %c0_i32, %c0_i32_0 : i32, i32
  }
  func.func @transform_2(%arg0: i32, %arg1: i32) -> (i32, i32) {
    %c0_i32 = arith.constant 0 : i32
    %c0_i32_0 = arith.constant 0 : i32
    %c0_i32_1 = arith.constant 0 : i32
    return %c0_i32, %c0_i32_0 : i32, i32
  }
  func.func @transform_3(%arg0: i32, %arg1: i32) -> (i32, i32, i32) {
    %c0_i32 = arith.constant 0 : i32
    %c0_i32_0 = arith.constant 0 : i32
    return %arg1, %arg0, %c0_i32 : i32, i32, i32
  }
}

</mosaic_0001>

<llo_original>
// kernel: tpu_custom_call.1
$region0: #{tpu_custom_call.1}
  #allocation0 [shape = 'u32[]', space=smem, size = 0x4, offset = 0x4, fixed_abs, tag = 'smem constant byte address 0x4 - core index']
  #allocation1 [shape = 'u32[144,128]{1,0:T(1,128)}', space=vmem, size = 0x12000, scoped, tag = 'internal scratch']
  #allocation2 [shape = 'f32[8,32]{1,0:T(8,128)}', space=vmem, size = 0x1000, scoped, tag = 'scratch operand']
  %s0 = inlined_call_operand.vmem [shape: f32[256,32], index: 0, kind: input, shape index: {}]
  %s1 = inlined_call_operand.vmem [shape: f32[1,32], index: 1, kind: input, shape index: {}]
  %s2 = inlined_call_operand.vmem [shape: f32[1,32], index: 2, kind: input, shape index: {}]
  %s3 = inlined_call_operand.hbm [shape: f32[2,8,32], index: 3, kind: output, shape index: {}]
  %s4 = sld [smem:[#allocation0]]
  $region26: #{tpu_custom_call.1} parent=0
    _
  %s6 = ssub.s32 1, %s4
  %s7 = scalar_select 0, %s6, %s4
  $region1: #{tpu_custom_call.1} parent=0
    #allocation3 [shape = 'u8[8192]{0}', space=vmem, size = 0x2000, scoped, tag = 'output window, operand 0, single buffered']
    #allocation4 [shape = 's32[1]{0}', space=sflag, size = 0x4, scoped, tag = 'scoped memory for tpu_custom_call.1']
    %8 = vsyncpa [#allocation4], 0
    // Predicated region
    $region2: #{tpu_custom_call.1} parent=1 // pred_check
      _
    $region3: #{tpu_custom_call.1} parent=1 // pred_check_branch
      %10 = sbr.rel (0) target = $region5
    $region4: #{tpu_custom_call.1} parent=1 // pred_region
      _
    $region5: #{tpu_custom_call.1} parent=1 // pred_fallthru
      _
    // Predicated region
    $region6: #{tpu_custom_call.1} parent=1 // pred_check
      _
    $region7: #{tpu_custom_call.1} parent=1 // pred_check_branch
      %12 = sbr.rel (0) target = $region9
    $region8: #{tpu_custom_call.1} parent=1 // pred_region
      _
    $region9: #{tpu_custom_call.1} parent=1 // pred_fallthru
      _
    // Predicated region
    $region10: #{tpu_custom_call.1} parent=1 // pred_check
      _
    $region11: #{tpu_custom_call.1} parent=1 // pred_check_branch
      %14 = sbr.rel (0) target = $region13
    $region12: #{tpu_custom_call.1} parent=1 // pred_region
      _
    $region13: #{tpu_custom_call.1} parent=1 // pred_fallthru
      _
    %p15 = scmp.eq.s32.totalorder 0, 0
    // Predicated region
    $region14: #{tpu_custom_call.1} parent=1 // pred_check
      %p16 = pneg %p15
    $region15: #{tpu_custom_call.1} parent=1 // pred_check_branch
      %18 = sbr.rel (%p16) target = $region17
    $region16: #{tpu_custom_call.1} parent=1 // pred_region
      %v19 = vld [vmem:[%s0] sm:$0xff]
      %vm20 = vcmask 261120
      %v21 = vsel %vm20, %v19, 0.0
      %22 = vadd.xlane.f32.xlu0 %v21
      %v23 = vpop.xlane.xlu0 %22
      %v24 = vrcp.pop 32.0
      %v25 = vmul.f32 %v23, %v24
      %v26 = vsub.f32 %v19, %v25
      %v27 = vmul.f32 %v26, %v26
      %v28 = vsel %vm20, %v27, 0.0
      %29 = vadd.xlane.f32.xlu0 %v28
      %v30 = vpop.xlane.xlu0 %29
      %v31 = vmul.f32 %v30, %v24
      %v32 = vadd.f32 %v31, 1e-06
      %v33 = vrsqrt.pop %v32
      %v34 = vmul.f32 %v26, %v33
      %v35 = vld [vmem:[%s1] sm:$0x1]
      %v37 = vlaneseq
      %v38 = vshrl.u32 %v37, 7
      %v39 = vsub.s32 0, %v38
      %v40 = vrot.slane %v35, %v39
      %v42 = vmul.f32 %v34, %v40
      %v43 = vld [vmem:[%s2] sm:$0x1]
      %v45 = vlaneseq
      %v46 = vshrl.u32 %v45, 7
      %v47 = vsub.s32 0, %v46
      %v48 = vrot.slane %v43, %v47
      %v50 = vadd.f32 %v42, %v48
      %51 = vst.msk [vmem:[#allocation2] sm:$0xff] %vm20, %v50
    $region17: #{tpu_custom_call.1} parent=1 // pred_fallthru
      _
    %v52 = vld [vmem:[#allocation2] sm:$0xff]
    %vm53 = vcmask 261120
    %54 = vst.msk [vmem:[#allocation3] sm:$0xff] %vm53, %v52
    %55 = vst.msk [vmem:[#allocation3 + $0x8] sm:$0xff] %vm53, %v52
    // Predicated region
    $region18: #{tpu_custom_call.1} parent=1 // pred_check
      _
    $region19: #{tpu_custom_call.1} parent=1 // pred_check_branch
      %57 = sbr.rel (0) target = $region21
    $region20: #{tpu_custom_call.1} parent=1 // pred_region
      %s59 = ssub.s32 256, 256
      %60 = vsyncadd [#allocation4], %s59
      %s61 = sshll.u32 [#allocation3], 4
      %s62 = int_to_ptr.vmem [resolvable:$true] %s61
      %67 = dma.vmem_to_hbm [thread:$0]  %s62, 256, %s3, [#allocation4], 128, 128, 8
    $region21: #{tpu_custom_call.1} parent=1 // pred_fallthru
      _
    // Predicated region
    $region22: #{tpu_custom_call.1} parent=1 // pred_check
      _
    $region23: #{tpu_custom_call.1} parent=1 // pred_check_branch
      %69 = sbr.rel (0) target = $region25
    $region24: #{tpu_custom_call.1} parent=1 // pred_region
      %70 = dma.done [#allocation4], 256
    $region25: #{tpu_custom_call.1} parent=1 // pred_fallthru
      _
    %71 = vsyncpa [#allocation4], 1

</llo_original>
